<compile_context>
chip_gen: v5e
topology: v5e:2x2
jax: 0.10.0
libtpu: 0.0.40
codegen_flags: <defaults>
</compile_context>

<pallas_src>
import functools

import numpy as np
import jax
import jax.numpy as jnp
from jax.experimental import pallas as pl
from jax.experimental.pallas import tpu as pltpu


# --------------------------------------------------------------------------
# Parameter construction (mirrors init_kernels(..., invers=True))
# --------------------------------------------------------------------------
def make_istft_params(win_len, win_inc, fft_len, win_type="hamming"):
    if win_type is None or win_type == "None":
        window = np.ones(win_len, dtype=np.float64)
    elif win_type == "hamming":
        n = np.arange(win_len)
        # periodic Hamming == scipy get_window('hamming', win_len, fftbins=True)
        window = 0.54 - 0.46 * np.cos(2.0 * np.pi * n / win_len)
    else:
        raise ValueError(f"unsupported win_type {win_type}")

    N = fft_len
    fourier_basis = np.fft.rfft(np.eye(N))[:win_len]          # (win_len, N//2+1)
    real_kernel = np.real(fourier_basis)
    imag_kernel = np.imag(fourier_basis)
    kernel = np.concatenate([real_kernel, imag_kernel], 1).T  # (N+2, win_len)
    kernel = np.linalg.pinv(kernel).T                         # invers=True
    kernel = kernel * window                                  # broadcast over win_len
    kernel = kernel[:, None, :]                               # (N+2, 1, win_len)
    return (kernel.astype(np.float32),
            window[None, :, None].astype(np.float32))         # (1, win_len, 1)


# --------------------------------------------------------------------------
# Pallas kernel
#   grid = (B, n_t)  — batch "parallel", frame tiles "arbitrary" (carry axis)
#   x_ref    : (1, tT, C_pad)       spectrum tile, frames-major (MXU-native lhs)
#   w_ref    : (C_pad, R*S_pad)     synthesis basis in fold layout
#   norm_ref : (R, S_pad)           rows 0..R-2: head correction, row R-1: steady 1/coff
#   o_ref    : (1, tT, S_pad)       this tile's folded output rows
#   carry_ref: (max(R-1,1), S_pad)  overlap rows spilling into the next tile
# --------------------------------------------------------------------------
def _istft_kernel(x_ref, w_ref, norm_ref, o_ref, carry_ref, *, tT, R, S_pad):
    ti = pl.program_id(1)

    if R > 1:
        @pl.when(ti == 0)
        def _init_carry():
            carry_ref[...] = jnp.zeros_like(carry_ref)

    # MXU-native matmul: (tT, C_pad) @ (C_pad, R*S_pad) -> R lane-aligned chunks.
    frames = jnp.dot(x_ref[0], w_ref[...], preferred_element_type=jnp.float32)

    # Overlap-add (fold) in registers; chunk r is shifted down by r rows.
    acc = frames[:, 0:S_pad]
    if R > 1:
        acc = acc + jnp.concatenate(
            [carry_ref[...],
             jnp.zeros((tT - (R - 1), S_pad), jnp.float32)], axis=0)
        carry = jnp.zeros((R - 1, S_pad), jnp.float32)
        for r in range(1, R):                              # R is tiny (2-6), static
            chunk = frames[:, r * S_pad:(r + 1) * S_pad]   # (tT, S_pad)
            acc = acc + jnp.concatenate(
                [jnp.zeros((r, S_pad), jnp.float32), chunk[:tT - r, :]], axis=0)
            spill = chunk[tT - r:, :]                      # (r, S_pad) -> next tile
            if r < R - 1:
                spill = jnp.concatenate(
                    [spill, jnp.zeros((R - 1 - r, S_pad), jnp.float32)], axis=0)
            carry = carry + spill
        carry_ref[...] = carry

    # Steady-state OLA normalization; one aligned, lane-dense store per tile.
    o_ref[0, :, :] = acc * norm_ref[R - 1:R, :]

    if R > 1:
        # The first R-1 rows of the whole signal have a partial-overlap coff.
        @pl.when(ti == 0)
        def _fix_head():
            o_ref[0, 0:R - 1, :] = o_ref[0, 0:R - 1, :] * norm_ref[0:R - 1, :]


# --------------------------------------------------------------------------
# ConviSTFT.forward equivalent (constants precomputed once per config)
# --------------------------------------------------------------------------
class ConviSTFT:
    def __init__(self, win_len, win_inc, fft_len=None, win_type="hamming",
                 feature_type="real", tile_t=512, compute_dtype=jnp.float32):
        if fft_len is None:
            fft_len = int(2 ** np.ceil(np.log2(win_len)))
        assert tile_t % 8 == 0
        self.win_len, self.stride, self.fft_len = win_len, win_inc, fft_len
        self.feature_type = feature_type
        self.tile_t = tile_t
        self.compute_dtype = compute_dtype

        weight, window = make_istft_params(win_len, win_inc, fft_len, win_type)
        self.weight, self.window = weight, window          # kept for the reference

        C = weight.shape[0]                                # fft_len + 2
        F_, S = win_len, win_inc
        R = -(-F_ // S)                                    # ceil(win_len / stride)
        S_pad = -(-S // 128) * 128                         # lane-dense fold width
        C_pad = -(-C // 8) * 8                             # sublane-aligned contraction
        assert tile_t >= R
        self.C, self.F, self.S, self.R = C, F_, S, R
        self.S_pad, self.C_pad = S_pad, C_pad

        # Synthesis basis in fold layout: (C_pad, R, S_pad) -> (C_pad, R*S_pad).
        Wf = np.zeros((C_pad, R, S_pad), np.float32)
        w2 = np.zeros((C, R * S), np.float32)
        w2[:, :F_] = weight[:, 0, :]
        Wf[:C, :, :S] = w2.reshape(C, R, S)
        self.W = jnp.asarray(Wf.reshape(C_pad, R * S_pad), dtype=compute_dtype)

        # OLA normalization (data independent), compressed to R rows:
        #   row R-1   : 1 / (steady-state coff + 1e-8)
        #   rows 0..R-2: multiplicative correction for output rows 0..R-2
        wsq = np.zeros(R * S, np.float32)
        wsq[:F_] = np.asarray(window[0, :, 0], np.float32) ** 2
        wsq_rows = wsq.reshape(R, S)
        coff_steady = wsq_rows.sum(0) + 1e-8
        tbl = np.ones((R, S_pad), np.float32)
        tbl[R - 1, :S] = 1.0 / coff_steady
        for k in range(R - 1):
            coff_head = wsq_rows[:k + 1].sum(0) + 1e-8
            tbl[k, :S] = coff_steady / coff_head
        self.norm_tbl = jnp.asarray(tbl)

    def __call__(self, inputs, phase=None):
        """inputs: [B, fft_len+2, T] (or mags [B, fft_len//2+1, T] with phase)
        returns : [B, 1, (T-1)*stride + win_len - 2*(win_len-stride)]"""
        if phase is not None:                              # elementwise prep (glue)
            real = inputs * jnp.cos(phase)
            imag = inputs * jnp.sin(phase)
            inputs = jnp.concatenate([real, imag], axis=1)

        B, C, T = inputs.shape
        assert C == self.C
        S, S_pad, R, F_, C_pad = self.S, self.S_pad, self.R, self.F, self.C_pad
        assert T >= R, "need at least ceil(win_len/stride) frames"

        tT = (-(-T // 8) * 8) if T <= self.tile_t else self.tile_t
        T_pad = -(-T // tT) * tT
        n_t = T_pad // tT

        # TODO(synk): ideally the upstream producer emits [B, T, C] directly;
        # this transpose + pad is a single mem-bound XLA pass in the wrapper.
        x = jnp.transpose(inputs, (0, 2, 1))
        x = jnp.pad(x, ((0, 0), (0, T_pad - T), (0, C_pad - C)))
        x = x.astype(self.compute_dtype)

        kernel = functools.partial(_istft_kernel, tT=tT, R=R, S_pad=S_pad)
        folded = pl.pallas_call(
            kernel,
            out_shape=jax.ShapeDtypeStruct((B, T_pad, S_pad), jnp.float32),
            grid_spec=pltpu.PrefetchScalarGridSpec(
                num_scalar_prefetch=0,
                grid=(B, n_t),
                in_specs=[
                    pl.BlockSpec((1, tT, C_pad), lambda b, ti: (b, ti, 0)),
                    pl.BlockSpec((C_pad, R * S_pad), lambda b, ti: (0, 0)),
                    pl.BlockSpec((R, S_pad), lambda b, ti: (0, 0)),
                ],
                out_specs=pl.BlockSpec((1, tT, S_pad), lambda b, ti: (b, ti, 0)),
                scratch_shapes=[pltpu.VMEM((max(R - 1, 1), S_pad), jnp.float32)],
            ),
            compiler_params=pltpu.CompilerParams(
                dimension_semantics=("parallel", "arbitrary")),
        )(x, self.W, self.norm_tbl)

        # Fold layout -> samples + crop (free XLA slice/reshape in the wrapper).
        out = folded[:, :, :S].reshape(B, 1, T_pad * S)
        return out[:, :, F_ - S:T * S]


# --------------------------------------------------------------------------
# Pure numpy reference (mirrors the F.conv_transpose1d path of the PyTorch module)
# --------------------------------------------------------------------------
def ref_conv_istft(x, weight, window, win_len, stride):
    B, C, T = x.shape
    F_ = weight.shape[2]
    L = (T - 1) * stride + F_
    out = np.zeros((B, 1, L), dtype=np.float32)
    Wm = weight[:, 0, :]                                   # (C, F)
    for b in range(B):
        for t in range(T):
            out[b, 0, t * stride:t * stride + F_] += x[b, :, t] @ Wm
    wsq = window[0, :, 0] ** 2
    coff = np.zeros(L, dtype=np.float32)
    for t in range(T):
        coff[t * stride:t * stride + F_] += wsq
    out = out / (coff + 1e-8)
    crop = win_len - stride
    return out[..., crop:-crop]


if __name__ == "__main__":
    root = jax.random.PRNGKey(0)
    k1, k2, k3 = jax.random.split(root, 3)

    # ---- test 1: single-tile path (demo shapes) ----
    win_len, win_inc, fft_len = 16, 8, 16
    B, T, C = 2, 8, fft_len + 2
    istft = ConviSTFT(win_len, win_inc, fft_len, "hamming")
    x = jax.random.normal(k1, (B, C, T), dtype=jnp.float32)
    out = jax.block_until_ready(istft(x))
    ref = ref_conv_istft(np.asarray(x), istft.weight, istft.window, win_len, win_inc)
    assert out.shape == ref.shape, (out.shape, ref.shape)
    assert np.allclose(np.asarray(out), ref, atol=2e-3, rtol=2e-3), \
        float(np.abs(np.asarray(out) - ref).max())

    # ---- test 2: multi-tile path (carry across tiles, T not a multiple of tT) ----
    istft2 = ConviSTFT(win_len, win_inc, fft_len, "hamming", tile_t=16)
    T2 = 40
    x2 = jax.random.normal(k2, (B, C, T2), dtype=jnp.float32)
    out2 = jax.block_until_ready(istft2(x2))
    ref2 = ref_conv_istft(np.asarray(x2), istft2.weight, istft2.window, win_len, win_inc)
    assert out2.shape == ref2.shape, (out2.shape, ref2.shape)
    assert np.allclose(np.asarray(out2), ref2, atol=2e-3, rtol=2e-3), \
        float(np.abs(np.asarray(out2) - ref2).max())

    # ---- test 3: stride that does not divide win_len (partial head rows kept) ----
    istft3 = ConviSTFT(16, 6, 16, "hamming", tile_t=16)
    T3 = 21
    x3 = jax.random.normal(k3, (B, C, T3), dtype=jnp.float32)
    out3 = jax.block_until_ready(istft3(x3))
    ref3 = ref_conv_istft(np.asarray(x3), istft3.weight, istft3.window, 16, 6)
    assert out3.shape == ref3.shape, (out3.shape, ref3.shape)
    assert np.allclose(np.asarray(out3), ref3, atol=2e-3, rtol=2e-3), \
        float(np.abs(np.asarray(out3) - ref3).max())

    print("KERNEL_OK")
</pallas_src>

<mosaic_0001>
module attributes {stable_mosaic.version = 11 : i64} {
  func.func @_istft_kernel(%arg0: i32, %arg1: i32, %arg2: memref<1x8x24xf32, #tpu.memory_space<vmem>>, %arg3: memref<24x256xf32, #tpu.memory_space<vmem>>, %arg4: memref<2x128xf32, #tpu.memory_space<vmem>>, %arg5: memref<1x8x128xf32, #tpu.memory_space<vmem>>, %arg6: memref<1x128xf32, #tpu.memory_space<vmem>>) attributes {dimension_semantics = [#tpu.dimension_semantics<parallel>, #tpu.dimension_semantics<arbitrary>], iteration_bounds = array<i64: 2, 1>, scalar_prefetch = 0 : i64, scratch_operands = 1 : i64, tpu.core_type = #tpu.core_type<tc>, window_params = [{transform_indices = @transform_0, window_bounds = array<i64: 1, 8, 24>}, {pipeline_mode = #tpu.pipeline_mode<synchronous>, transform_indices = @transform_1, window_bounds = array<i64: 24, 256>}, {pipeline_mode = #tpu.pipeline_mode<synchronous>, transform_indices = @transform_2, window_bounds = array<i64: 2, 128>}, {transform_indices = @transform_3, window_bounds = array<i64: 1, 8, 128>}]} {
    %c0_i32 = arith.constant 0 : i32
    %0 = arith.cmpi eq, %arg1, %c0_i32 : i32
    %1 = arith.extui %0 : i1 to i32
    %c0_i32_0 = arith.constant 0 : i32
    %2 = arith.cmpi ne, %1, %c0_i32_0 : i32
    scf.if %2 {
      %cst_18 = arith.constant 0.000000e+00 : f32
      %30 = vector.broadcast %cst_18 : f32 to vector<1x128xf32>
      %c0_19 = arith.constant 0 : index
      %c0_20 = arith.constant 0 : index
      %31 = vector.load %arg6[%c0_19, %c0_20] : memref<1x128xf32, #tpu.memory_space<vmem>>, vector<1x128xf32>
      tpu.vector_store %arg6[%c0_19, %c0_20], %30 {strides = array<i32>} : memref<1x128xf32, #tpu.memory_space<vmem>>, vector<1x128xf32>,
    } else {
    }
    %c0 = arith.constant 0 : index
    %c0_1 = arith.constant 0 : index
    %c0_2 = arith.constant 0 : index
    %3 = vector.load %arg2[%c0, %c0_1, %c0_2] : memref<1x8x24xf32, #tpu.memory_space<vmem>>, vector<1x8x24xf32>
    %4 = vector.shape_cast %3 : vector<1x8x24xf32> to vector<8x24xf32>
    %c0_3 = arith.constant 0 : index
    %c0_4 = arith.constant 0 : index
    %5 = vector.load %arg3[%c0_3, %c0_4] : memref<24x256xf32, #tpu.memory_space<vmem>>, vector<24x256xf32>
    %cst = arith.constant dense<0.000000e+00> : vector<8x256xf32>
    %6 = tpu.matmul %4, %5, %cst {dimension_numbers = #tpu.dot_dimension_numbers<[1], [0], [0], [1], [0, 0, 1, 1], [], []>} : vector<8x24xf32>, vector<24x256xf32>, vector<8x256xf32> -> vector<8x256xf32>
    %7 = vector.extract_strided_slice %6 {offsets = [0, 0], sizes = [8, 128], strides = [1, 1]} : vector<8x256xf32> to vector<8x128xf32>
    %c0_5 = arith.constant 0 : index
    %c0_6 = arith.constant 0 : index
    %8 = vector.load %arg6[%c0_5, %c0_6] : memref<1x128xf32, #tpu.memory_space<vmem>>, vector<1x128xf32>
    %cst_7 = arith.constant 0.000000e+00 : f32
    %9 = vector.broadcast %cst_7 : f32 to vector<7x128xf32>
    %10 = tpu.concatenate %8, %9 in 0 : vector<1x128xf32>, vector<7x128xf32> -> vector<8x128xf32>
    %11 = arith.addf %7, %10 : vector<8x128xf32>
    %cst_8 = arith.constant 0.000000e+00 : f32
    %12 = vector.broadcast %cst_8 : f32 to vector<1x128xf32>
    %13 = vector.extract_strided_slice %6 {offsets = [0, 128], sizes = [8, 128], strides = [1, 1]} : vector<8x256xf32> to vector<8x128xf32>
    %cst_9 = arith.constant 0.000000e+00 : f32
    %14 = vector.broadcast %cst_9 : f32 to vector<1x128xf32>
    %15 = vector.extract_strided_slice %13 {offsets = [0, 0], sizes = [7, 128], strides = [1, 1]} : vector<8x128xf32> to vector<7x128xf32>
    %16 = tpu.concatenate %14, %15 in 0 : vector<1x128xf32>, vector<7x128xf32> -> vector<8x128xf32>
    %17 = arith.addf %11, %16 : vector<8x128xf32>
    %18 = vector.extract_strided_slice %13 {offsets = [7, 0], sizes = [1, 128], strides = [1, 1]} : vector<8x128xf32> to vector<1x128xf32>
    %19 = arith.addf %12, %18 : vector<1x128xf32>
    %c0_10 = arith.constant 0 : index
    %c0_11 = arith.constant 0 : index
    %20 = vector.load %arg6[%c0_10, %c0_11] : memref<1x128xf32, #tpu.memory_space<vmem>>, vector<1x128xf32>
    tpu.vector_store %arg6[%c0_10, %c0_11], %19 {strides = array<i32>} : memref<1x128xf32, #tpu.memory_space<vmem>>, vector<1x128xf32>,
    %c1 = arith.constant 1 : index
    %c0_12 = arith.constant 0 : index
    %21 = vector.load %arg4[%c1, %c0_12] : memref<2x128xf32, #tpu.memory_space<vmem>>, vector<1x128xf32>
    %22 = vector.broadcast %21 : vector<1x128xf32> to vector<8x128xf32>
    %23 = arith.mulf %17, %22 : vector<8x128xf32>
    %c0_13 = arith.constant 0 : index
    %c0_14 = arith.constant 0 : index
    %c0_15 = arith.constant 0 : index
    %24 = vector.load %arg5[%c0_13, %c0_14, %c0_15] : memref<1x8x128xf32, #tpu.memory_space<vmem>>, vector<1x8x128xf32>
    %25 = vector.shape_cast %24 : vector<1x8x128xf32> to vector<8x128xf32>
    %26 = vector.shape_cast %23 : vector<8x128xf32> to vector<1x8x128xf32>
    tpu.vector_store %arg5[%c0_13, %c0_14, %c0_15], %26 {strides = array<i32>} : memref<1x8x128xf32, #tpu.memory_space<vmem>>, vector<1x8x128xf32>,
    %c0_i32_16 = arith.constant 0 : i32
    %27 = arith.cmpi eq, %arg1, %c0_i32_16 : i32
    %28 = arith.extui %27 : i1 to i32
    %c0_i32_17 = arith.constant 0 : i32
    %29 = arith.cmpi ne, %28, %c0_i32_17 : i32
    scf.if %29 {
      %c0_18 = arith.constant 0 : index
      %c0_19 = arith.constant 0 : index
      %c0_20 = arith.constant 0 : index
      %30 = vector.load %arg5[%c0_18, %c0_19, %c0_20] : memref<1x8x128xf32, #tpu.memory_space<vmem>>, vector<1x1x128xf32>
      %31 = vector.shape_cast %30 : vector<1x1x128xf32> to vector<1x128xf32>
      %c0_21 = arith.constant 0 : index
      %c0_22 = arith.constant 0 : index
      %32 = vector.load %arg4[%c0_21, %c0_22] : memref<2x128xf32, #tpu.memory_space<vmem>>, vector<1x128xf32>
      %33 = arith.mulf %31, %32 : vector<1x128xf32>
      %c0_23 = arith.constant 0 : index
      %c0_24 = arith.constant 0 : index
      %c0_25 = arith.constant 0 : index
      %34 = vector.load %arg5[%c0_23, %c0_24, %c0_25] : memref<1x8x128xf32, #tpu.memory_space<vmem>>, vector<1x1x128xf32>
      %35 = vector.shape_cast %34 : vector<1x1x128xf32> to vector<1x128xf32>
      %36 = vector.shape_cast %33 : vector<1x128xf32> to vector<1x1x128xf32>
      tpu.vector_store %arg5[%c0_23, %c0_24, %c0_25], %36 {strides = array<i32>} : memref<1x8x128xf32, #tpu.memory_space<vmem>>, vector<1x1x128xf32>,
    } else {
    }
    return
  }
  func.func @transform_0(%arg0: i32, %arg1: i32) -> (i32, i32, i32) {
    %c0_i32 = arith.constant 0 : i32
    %c0_i32_0 = arith.constant 0 : i32
    return %arg0, %arg1, %c0_i32 : i32, i32, i32
  }
  func.func @transform_1(%arg0: i32, %arg1: i32) -> (i32, i32) {
    %c0_i32 = arith.constant 0 : i32
    %c0_i32_0 = arith.constant 0 : i32
    %c0_i32_1 = arith.constant 0 : i32
    return %c0_i32, %c0_i32_0 : i32, i32
  }
  func.func @transform_2(%arg0: i32, %arg1: i32) -> (i32, i32) {
    %c0_i32 = arith.constant 0 : i32
    %c0_i32_0 = arith.constant 0 : i32
    %c0_i32_1 = arith.constant 0 : i32
    return %c0_i32, %c0_i32_0 : i32, i32
  }
  func.func @transform_3(%arg0: i32, %arg1: i32) -> (i32, i32, i32) {
    %c0_i32 = arith.constant 0 : i32
    %c0_i32_0 = arith.constant 0 : i32
    return %arg0, %arg1, %c0_i32 : i32, i32, i32
  }
}

</mosaic_0001>

<llo_original>
// kernel: tpu_custom_call.1
$region0: #{tpu_custom_call.1}
  #allocation0 [shape = 'u32[]', space=smem, size = 0x4, offset = 0x4, fixed_abs, tag = 'smem constant byte address 0x4 - core index']
  #allocation1 [shape = 'u32[72,128]{1,0:T(1,128)}', space=vmem, size = 0x9000, scoped, tag = 'internal scratch']
  #allocation2 [shape = 'f32[1,128]{1,0:T(1,128)}', space=vmem, size = 0x200, scoped, tag = 'scratch operand']
  %s0 = inlined_call_operand.hbm [shape: f32[2,8,24], index: 0, kind: input, shape index: {}]
  %s1 = inlined_call_operand.hbm [shape: f32[24,256], index: 1, kind: input, shape index: {}]
  %s2 = inlined_call_operand.hbm [shape: f32[2,128], index: 2, kind: input, shape index: {}]
  %s3 = inlined_call_operand.hbm [shape: f32[2,8,128], index: 3, kind: output, shape index: {}]
  %s4 = sld [smem:[#allocation0]]
  $region65: #{tpu_custom_call.1} parent=0
    _
  %s6 = ssub.s32 1, %s4
  %s7 = scalar_select 0, %s6, %s4
  $region1: #{tpu_custom_call.1} parent=0
    #allocation3 [shape = 'u8[8192]{0}', space=vmem, size = 0x2000, scoped, tag = 'input window, operand 0']
    #allocation4 [shape = 's32[2]{0}', space=sflag, size = 0x8, scoped, tag = 'scoped memory for tpu_custom_call.1']
    #allocation5 [shape = 's32[2]{0}', space=sflag, size = 0x8, scoped, tag = 'scoped memory for tpu_custom_call.1']
    #allocation6 [shape = 'u8[24576]{0}', space=vmem, size = 0x6000, scoped, tag = 'input window, operand 1, single buffered']
    #allocation7 [shape = 's32[1]{0}', space=sflag, size = 0x4, scoped, tag = 'scoped memory for tpu_custom_call.1']
    #allocation8 [shape = 'u8[1024]{0}', space=vmem, size = 0x400, scoped, tag = 'input window, operand 2, single buffered']
    #allocation9 [shape = 'u8[8192]{0}', space=vmem, size = 0x2000, scoped, tag = 'output window, operand 0']
    %8 = vsyncpa [#allocation4], 0
    %s9 = scalar_lea.sflag [#allocation4], 1
    %10 = vsyncpa %s9, 0
    %11 = vsyncpa [#allocation7], 0
    %12 = vsyncpa [#allocation5], 0
    %s13 = scalar_lea.sflag [#allocation5], 1
    %14 = vsyncpa %s13, 0
    loop: start=0, step=1, limit=4
    $region2: #{tpu_custom_call.1} parent=1 // loop_pre_header
      _
    $region3: #{tpu_custom_call.1} parent=1 // loop_header
      %s16 = sphi 0, %s20
      %p17 = scmp.ge.s32.totalorder %s16, 4
      %s23 = sphi 0, %s35
      %s24 = sphi 0, %s31
      %s25 = sphi 0, %s23
      %s26 = sphi 0, %s24
      %s27 = sphi 0, %s25
      %s28 = sphi 0, %s26
      %s40 = sphi 0, %s42
      %s43 = sphi 0, %s40
      %s44 = sphi 0, %s43
      %s60 = sphi 0, %s44
      %s64 = sphi 0, %s64
      %s66 = sphi 0, %s64
      %s67 = sphi 0, %s66
      %s81 = sphi 0, %s67
      %s85 = sphi 0, %s85
      %s87 = sphi 0, %s85
      %s88 = sphi 0, %s87
      %s102 = sphi 0, %s88
      %s110 = sphi 0, %s112
      %s113 = sphi 0, %s110
      %s114 = sphi 0, %s113
      %s130 = sphi 0, %s114
    $region4: #{tpu_custom_call.1} parent=1 // loop_header_branch
      %19 = sbr.rel (%p17) target = $region8
    $region5: #{tpu_custom_call.1} parent=1 // loop_body
      %s21 = ssub.s32 %s16, 1
      %s22 = ssub.s32 %s16, 2
      %s29 = sadd.s32 1, %s24
      %p30 = scmp.ge.s32.totalorder %s29, 1
      %s31 = scalar_select %p30, 0, %s29
      %s32 = sadd.s32 1, %s23
      %s33 = scalar_select %p30, %s32, %s23
      %p34 = scmp.ge.s32.totalorder %s33, 2
      %s35 = scalar_select %p34, 0, %s33
      %s36 = ssub.s32 %s23, %s35
      %s37 = ssub.s32 %s24, %s31
      %s38 = sor.u32 %s36, %s37
      %p39 = scmp.eq.s32.totalorder %s38, 0
      %s41 = sadd.s32 %s40, 1
      %s42 = scalar_select %p39, %s40, %s41
      %p45 = pneg %p39
      %p46 = scmp.eq.s32.totalorder %s16, 1
      %p47 = por %p45, %p46
      %p48 = scmp.ne.s32.totalorder %s40, %s43
      %p49 = scmp.eq.s32.totalorder %s16, 0
      %p50 = por %p48, %p49
      %p51 = scmp.ne.s32.totalorder %s40, %s43
      %p52 = scmp.eq.s32.totalorder %s21, 1
      %p53 = por %p51, %p52
      %p54 = scmp.ne.s32.totalorder %s43, %s44
      %p55 = scmp.eq.s32.totalorder %s21, 0
      %p56 = por %p54, %p55
      %p57 = scmp.ne.s32.totalorder %s43, %s44
      %p58 = scmp.eq.s32.totalorder %s22, 1
      %p59 = por %p57, %p58
      %p61 = scmp.ne.s32.totalorder %s44, %s60
      %p62 = scmp.eq.s32.totalorder %s22, 0
      %p63 = por %p61, %p62
      %s65 = sadd.s32 %s64, 1
      %p68 = scmp.eq.s32.totalorder %s16, 1
      %p69 = scmp.ne.s32.totalorder %s64, %s66
      %p70 = scmp.eq.s32.totalorder %s16, 0
      %p71 = por %p69, %p70
      %p72 = scmp.ne.s32.totalorder %s64, %s66
      %p73 = scmp.eq.s32.totalorder %s21, 1
      %p74 = por %p72, %p73
      %p75 = scmp.ne.s32.totalorder %s66, %s67
      %p76 = scmp.eq.s32.totalorder %s21, 0
      %p77 = por %p75, %p76
      %p78 = scmp.ne.s32.totalorder %s66, %s67
      %p79 = scmp.eq.s32.totalorder %s22, 1
      %p80 = por %p78, %p79
      %p82 = scmp.ne.s32.totalorder %s67, %s81
      %p83 = scmp.eq.s32.totalorder %s22, 0
      %p84 = por %p82, %p83
      %s86 = sadd.s32 %s85, 1
      %p89 = scmp.eq.s32.totalorder %s16, 1
      %p90 = scmp.ne.s32.totalorder %s85, %s87
      %p91 = scmp.eq.s32.totalorder %s16, 0
      %p92 = por %p90, %p91
      %p93 = scmp.ne.s32.totalorder %s85, %s87
      %p94 = scmp.eq.s32.totalorder %s21, 1
      %p95 = por %p93, %p94
      %p96 = scmp.ne.s32.totalorder %s87, %s88
      %p97 = scmp.eq.s32.totalorder %s21, 0
      %p98 = por %p96, %p97
      %p99 = scmp.ne.s32.totalorder %s87, %s88
      %p100 = scmp.eq.s32.totalorder %s22, 1
      %p101 = por %p99, %p100
      %p103 = scmp.ne.s32.totalorder %s88, %s102
      %p104 = scmp.eq.s32.totalorder %s22, 0
      %p105 = por %p103, %p104
      %s106 = ssub.s32 %s23, %s35
      %s107 = ssub.s32 %s24, %s31
      %s108 = sor.u32 %s106, %s107
      %p109 = scmp.eq.s32.totalorder %s108, 0
      %s111 = sadd.s32 %s110, 1
      %s112 = scalar_select %p109, %s110, %s111
      %p115 = pneg %p109
      %p116 = scmp.eq.s32.totalorder %s16, 1
      %p117 = por %p115, %p116
      %p118 = scmp.ne.s32.totalorder %s110, %s113
      %p119 = scmp.eq.s32.totalorder %s16, 0
      %p120 = por %p118, %p119
      %p121 = scmp.ne.s32.totalorder %s110, %s113
      %p122 = scmp.eq.s32.totalorder %s21, 1
      %p123 = por %p121, %p122
      %p124 = scmp.ne.s32.totalorder %s113, %s114
      %p125 = scmp.eq.s32.totalorder %s21, 0
      %p126 = por %p124, %p125
      %p127 = scmp.ne.s32.totalorder %s113, %s114
      %p128 = scmp.eq.s32.totalorder %s22, 1
      %p129 = por %p127, %p128
      %p131 = scmp.ne.s32.totalorder %s114, %s130
      %p132 = scmp.eq.s32.totalorder %s22, 0
      %p133 = por %p131, %p132
      %p134 = scmp.le.s32.totalorder 1, %s16
      %p135 = scmp.lt.s32.totalorder %s16, 3
      %p136 = pnand %p134, %p135
      %p137 = pneg %p136
      // Predicated region
      $region9: #{tpu_custom_call.1} parent=5 // pred_check
        _
      $region10: #{tpu_custom_call.1} parent=5 // pred_check_branch
        %139 = sbr.rel (%p136) target = $region12
      $region11: #{tpu_custom_call.1} parent=5 // pred_region
        %s140 = ssub.s32 %s16, 1
        // Predicated region
        $region13: #{tpu_custom_call.1} parent=11 // pred_check
          %p141 = pneg %p77
        $region14: #{tpu_custom_call.1} parent=11 // pred_check_branch
          %143 = sbr.rel (%p141) target = $region16
        $region15: #{tpu_custom_call.1} parent=11 // pred_region
          %145 = vsyncadd [#allocation7], 0
          %s146 = sshll.u32 %s1, 4
          %s147 = int_to_ptr.hbm [resolvable:$true] %s146
          %s148 = sshll.u32 [#allocation6], 4
          %s149 = int_to_ptr.vmem [resolvable:$true] %s148
          %154 = dma.hbm_to_vmem [thread:$0]  %s147, 768, %s149, [#allocation7], 256, 256, 16
        $region16: #{tpu_custom_call.1} parent=11 // pred_fallthru
          _
        // Predicated region
        $region17: #{tpu_custom_call.1} parent=11 // pred_check
          %p155 = pneg %p98
        $region18: #{tpu_custom_call.1} parent=11 // pred_check_branch
          %157 = sbr.rel (%p155) target = $region20
        $region19: #{tpu_custom_call.1} parent=11 // pred_region
          %159 = vsyncadd [#allocation7], 0
          %s161 = sshll.u32 %s2, 4
          %s162 = int_to_ptr.hbm [resolvable:$true] %s161
          %s163 = sshll.u32 [#allocation8], 4
          %s164 = int_to_ptr.vmem [resolvable:$true] %s163
          %166 = dma.hbm_to_vmem [thread:$0]  %s162, 32, %s164, [#allocation7]
        $region20: #{tpu_custom_call.1} parent=11 // pred_fallthru
          _
      $region12: #{tpu_custom_call.1} parent=5 // pred_fallthru
        _
      %p167 = scmp.lt.s32.totalorder %s16, 2
      // Predicated region
      $region21: #{tpu_custom_call.1} parent=5 // pred_check
        %p168 = pneg %p167
      $region22: #{tpu_custom_call.1} parent=5 // pred_check_branch
        %170 = sbr.rel (%p168) target = $region24
      $region23: #{tpu_custom_call.1} parent=5 // pred_region
        // Predicated region
        $region25: #{tpu_custom_call.1} parent=23 // pred_check
          %p171 = pneg %p50
        $region26: #{tpu_custom_call.1} parent=23 // pred_check_branch
          %173 = sbr.rel (%p171) target = $region28
        $region27: #{tpu_custom_call.1} parent=23 // pred_region
          %s174 = sand.u32 %s40, 1
          %s175 = scalar_lea.sflag [#allocation4], %s174
          %s176 = sand.u32 %s40, 1
          %s177 = smul.addr %s176, 8
          %s178 = scalar_lea.vmem [#allocation3], %s177
          %180 = vsyncadd %s175, 0
          %s181 = sadd.s32 %s24, %s23
          %s182 = smul.addr %s181, 8
          %s183 = scalar_lea.hbm %s0, %s182
          %s185 = sshll.u32 %s183, 4
          %s186 = int_to_ptr.hbm [resolvable:$true] %s185
          %s187 = sshll.u32 %s178, 4
          %s188 = int_to_ptr.vmem [resolvable:$true] %s187
          %190 = dma.hbm_to_vmem [thread:$0]  %s186, 128, %s188, %s175
        $region28: #{tpu_custom_call.1} parent=23 // pred_fallthru
          _
      $region24: #{tpu_custom_call.1} parent=5 // pred_fallthru
        _
      %p191 = scmp.le.s32.totalorder 1, %s16
      %p192 = scmp.lt.s32.totalorder %s16, 3
      %p193 = pnand %p191, %p192
      %p194 = pneg %p193
      // Predicated region
      $region29: #{tpu_custom_call.1} parent=5 // pred_check
        _
      $region30: #{tpu_custom_call.1} parent=5 // pred_check_branch
        %196 = sbr.rel (%p193) target = $region32
      $region31: #{tpu_custom_call.1} parent=5 // pred_region
        %s197 = ssub.s32 %s16, 1
        %s198 = sand.u32 %s43, 1
        %s199 = scalar_lea.sflag [#allocation4], %s198
        %s200 = sand.u32 %s43, 1
        %s201 = smul.addr %s200, 8
        %s202 = scalar_lea.vmem [#allocation3], %s201
        // Predicated region
        $region33: #{tpu_custom_call.1} parent=31 // pred_check
          %p203 = pneg %p56
        $region34: #{tpu_custom_call.1} parent=31 // pred_check_branch
          %205 = sbr.rel (%p203) target = $region36
        $region35: #{tpu_custom_call.1} parent=31 // pred_region
          %207 = dma.done %s199, 128
        $region36: #{tpu_custom_call.1} parent=31 // pred_fallthru
          _
        // Predicated region
        $region37: #{tpu_custom_call.1} parent=31 // pred_check
          %p208 = pneg %p77
        $region38: #{tpu_custom_call.1} parent=31 // pred_check_branch
          %210 = sbr.rel (%p208) target = $region40
        $region39: #{tpu_custom_call.1} parent=31 // pred_region
          %212 = dma.done [#allocation7], 768
        $region40: #{tpu_custom_call.1} parent=31 // pred_fallthru
          _
        // Predicated region
        $region41: #{tpu_custom_call.1} parent=31 // pred_check
          %p213 = pneg %p98
        $region42: #{tpu_custom_call.1} parent=31 // pred_check_branch
          %215 = sbr.rel (%p213) target = $region44
        $region43: #{tpu_custom_call.1} parent=31 // pred_region
          %217 = dma.done [#allocation7], 32
        $region44: #{tpu_custom_call.1} parent=31 // pred_fallthru
          _
        %s218 = sand.u32 %s43, 1
        %s219 = scalar_lea.sflag [#allocation4], %s218
        %s220 = sand.u32 %s43, 1
        %s221 = smul.addr %s220, 8
        %s222 = scalar_lea.vmem [#allocation3], %s221
        %p223 = pneg %p56
        %p224 = pneg %p53
        %p225 = pneg %p77
        %p226 = pneg %p74
        %p227 = pneg %p98
        %p228 = pneg %p95
        %p229 = pneg %p126
        %p230 = pneg %p123
        %s231 = sand.u32 %s113, 1
        %s232 = scalar_lea.sflag [#allocation5], %s231
        %s233 = sand.u32 %s113, 1
        %s234 = smul.addr %s233, 8
        %s235 = scalar_lea.vmem [#allocation9], %s234
        %p236 = scmp.eq.s32.totalorder %s26, 0
        // Predicated region
        $region45: #{tpu_custom_call.1} parent=31 // pred_check
          %p237 = pneg %p236
        $region46: #{tpu_custom_call.1} parent=31 // pred_check_branch
          %239 = sbr.rel (%p237) target = $region48
        $region47: #{tpu_custom_call.1} parent=31 // pred_region
          %240 = vst [vmem:[#allocation2] sm:$0x1] 0.0
        $region48: #{tpu_custom_call.1} parent=31 // pred_fallthru
          _
        %v241 = vld [vmem:[%s202] sm:$0xff]
        %v242 = vld [vmem:[#allocation6] sm:$0xff]
        %v243 = vld [vmem:[#allocation6 + $0x8] sm:$0xff]
        %v244 = vld [vmem:[#allocation6 + $0x10] sm:$0xff]
        %v245 = vld [vmem:[#allocation6 + $0x18] sm:$0xff]
        %v246 = vld [vmem:[#allocation6 + $0x20] sm:$0xff]
        %v247 = vld [vmem:[#allocation6 + $0x28] sm:$0xff]
        %vm248 = vcmask 195584
        %v250 = vsel %vm248, %v241, 0
        %252 = vmatpush.msra.mxu0 0.0
        %253 = vmatpush.msra.mxu0 0.0
        %254 = vmatpush.msra.mxu0 0.0
        %255 = vmatpush.msra.mxu0 0.0
        %256 = vmatpush.msra.mxu0 0.0
        %257 = vmatpush.msra.mxu0 0.0
        %258 = vmatpush.msra.mxu0 0.0
        %259 = vmatpush.msra.mxu0 0.0
        %260 = vmatpush.msra.mxu0 0.0
        %261 = vmatpush.msra.mxu0 0.0
        %262 = vmatpush.msra.mxu0 0.0
        %263 = vmatpush.msra.mxu0 0.0
        %264 = vmatpush.msra.mxu0 0.0
        %265 = vmatpush.msra.mxu0 %v246
        %266 = vmatpush.msra.mxu0 %v244
        %267 = vmatpush.msra.mxu0 %v242
        %268 = vmatmul.f32.gmra.mxu0 %v250
        %v269 = vpop.f32.mrf.mxu0
        %v270 = vadd.f32 0.0, %v269
        %271 = vdwg.mxu0
        %272 = vmatpush.msra.mxu0 0.0
        %273 = vmatpush.msra.mxu0 0.0
        %274 = vmatpush.msra.mxu0 0.0
        %275 = vmatpush.msra.mxu0 0.0
        %276 = vmatpush.msra.mxu0 0.0
        %277 = vmatpush.msra.mxu0 0.0
        %278 = vmatpush.msra.mxu0 0.0
        %279 = vmatpush.msra.mxu0 0.0
        %280 = vmatpush.msra.mxu0 0.0
        %281 = vmatpush.msra.mxu0 0.0
        %282 = vmatpush.msra.mxu0 0.0
        %283 = vmatpush.msra.mxu0 0.0
        %284 = vmatpush.msra.mxu0 0.0
        %285 = vmatpush.msra.mxu0 %v247
        %286 = vmatpush.msra.mxu0 %v245
        %287 = vmatpush.msra.mxu0 %v243
        %288 = vmatmul.f32.gmra.mxu0 %v250
        %v289 = vpop.f32.mrf.mxu0
        %v290 = vadd.f32 0.0, %v289
        %291 = vdwg.mxu0
        %v292 = vld [vmem:[#allocation2] sm:$0x1]
        %vm293 = vcmask 1040384
        %v294 = vsel %vm293, %v292, 0.0
        %v295 = vadd.f32 %v270, %v294
        %v297 = vrot.slane %v290, 7
        %v299 = vsel %vm293, 0.0, %v297
        %v300 = vadd.f32 %v295, %v299
        %v301 = vadd.f32 %v290, 0.0
        %302 = vst [vmem:[#allocation2 - $0x7] sm:$0x80] %v301
        %v303 = vld [vmem:[#allocation8 + $0x1] sm:$0x1]
        %v304 = vperm.slane %v303, 0
        %v305 = vmul.f32 %v300, %v304
        %306 = vst [vmem:[%s235] sm:$0xff] %v305
        // Predicated region
        $region49: #{tpu_custom_call.1} parent=31 // pred_check
          %p307 = pneg %p236
        $region50: #{tpu_custom_call.1} parent=31 // pred_check_branch
          %309 = sbr.rel (%p307) target = $region52
        $region51: #{tpu_custom_call.1} parent=31 // pred_region
          %v310 = vld [vmem:[%s235] sm:$0x1]
          %v311 = vld [vmem:[#allocation8] sm:$0x1]
          %v312 = vmul.f32 %v310, %v311
          %313 = vst [vmem:[%s235] sm:$0x1] %v312
        $region52: #{tpu_custom_call.1} parent=31 // pred_fallthru
          _
        %s314 = sand.u32 %s113, 1
        %s315 = scalar_lea.sflag [#allocation5], %s314
        %s316 = sand.u32 %s113, 1
        %s317 = smul.addr %s316, 8
        %s318 = scalar_lea.vmem [#allocation9], %s317
        // Predicated region
        $region53: #{tpu_custom_call.1} parent=31 // pred_check
          %p319 = pneg %p123
        $region54: #{tpu_custom_call.1} parent=31 // pred_check_branch
          %321 = sbr.rel (%p319) target = $region56
        $region55: #{tpu_custom_call.1} parent=31 // pred_region
          %323 = vsyncadd %s315, 0
          %s324 = sadd.s32 %s26, %s25
          %s325 = smul.addr %s324, 8
          %s326 = scalar_lea.hbm %s3, %s325
          %s328 = sshll.u32 %s318, 4
          %s329 = int_to_ptr.vmem [resolvable:$true] %s328
          %s330 = sshll.u32 %s326, 4
          %s331 = int_to_ptr.hbm [resolvable:$true] %s330
          %333 = dma.vmem_to_hbm [thread:$0]  %s329, 128, %s331, %s315
        $region56: #{tpu_custom_call.1} parent=31 // pred_fallthru
          _
      $region32: #{tpu_custom_call.1} parent=5 // pred_fallthru
        _
      %p334 = scmp.le.s32.totalorder 2, %s16
      // Predicated region
      $region57: #{tpu_custom_call.1} parent=5 // pred_check
        %p335 = pneg %p334
      $region58: #{tpu_custom_call.1} parent=5 // pred_check_branch
        %337 = sbr.rel (%p335) target = $region60
      $region59: #{tpu_custom_call.1} parent=5 // pred_region
        %s338 = ssub.s32 %s16, 2
        // Predicated region
        $region61: #{tpu_custom_call.1} parent=59 // pred_check
          %p339 = pneg %p129
        $region62: #{tpu_custom_call.1} parent=59 // pred_check_branch
          %341 = sbr.rel (%p339) target = $region64
        $region63: #{tpu_custom_call.1} parent=59 // pred_region
          %s342 = sand.u32 %s114, 1
          %s343 = scalar_lea.sflag [#allocation5], %s342
          %s344 = sand.u32 %s114, 1
          %s345 = smul.addr %s344, 8
          %s346 = scalar_lea.vmem [#allocation9], %s345
          %348 = dma.done %s343, 128
        $region64: #{tpu_custom_call.1} parent=59 // pred_fallthru
          _
      $region60: #{tpu_custom_call.1} parent=5 // pred_fallthru
        _
    $region6: #{tpu_custom_call.1} parent=1 // loop_footer
      %s20 = sadd.s32 1, %s16
    $region7: #{tpu_custom_call.1} parent=1 // loop_footer_branch
      %15 = sbr.rel target = $region3
    $region8: #{tpu_custom_call.1} parent=1 // loop_exit
      _
    %349 = vsyncpa [#allocation4], 1
    %s350 = scalar_lea.sflag [#allocation4], 1
    %351 = vsyncpa %s350, 1
    %352 = vsyncpa [#allocation7], 1
    %353 = vsyncpa [#allocation5], 1
    %s354 = scalar_lea.sflag [#allocation5], 1
    %355 = vsyncpa %s354, 1

</llo_original>
